<compile_context>
chip_gen: v6e
topology: v6e:2x2x1
jax: 0.10.0
libtpu: 0.0.40
codegen_flags: <defaults>
</compile_context>

<pallas_src>
import jax
import jax.numpy as jnp
from jax import lax
from jax.experimental import pallas as pl
from jax.experimental.pallas import tpu as pltpu


def _pure_strategy_kernel(steps_ref,   # VMEM (block_b, 1)   i32  clamped step counts
                          strat_ref,   # VMEM (1, T_pad)     i32  pure strategy row (zero-padded)
                          out_ref):    # VMEM (block_b, W)   f32  one-hot logits (lane-padded)
    block_b = steps_ref.shape[0]
    t_pad = strat_ref.shape[1]
    width = out_ref.shape[1]

    steps_col = steps_ref[...]                                        # (block_b, 1)
    t_ids = lax.broadcasted_iota(jnp.int32, (block_b, t_pad), 1)
    step_onehot = (t_ids == steps_col).astype(jnp.int32)              # (block_b, T_pad)
    # Gather pure_strategy[step] as a lane reduce (XLU slot): steps are clamped
    # to [0, horizon-1] in the wrapper, so padded strategy lanes are never hit.
    actions_col = jnp.sum(step_onehot * strat_ref[...], axis=1,
                          keepdims=True)                               # (block_b, 1)

    lane_ids = lax.broadcasted_iota(jnp.int32, (block_b, width), 1)
    # Actions outside [0, action_size) would silently produce an all-zero row
    # after the wrapper slice (torch's logits[action]=1 would raise instead).
    out_ref[...] = (lane_ids == actions_col).astype(jnp.float32)      # one lane-dense store


def pure_strategy_forward_batched(pure_strategy, step_counts, action_size,
                                  max_block_b=512):
    """Batched PureStrategy.forward.

    pure_strategy: int32 [T]   shared pure strategy (one action per time step)
    step_counts:   int32 [B]   per-env current step
    returns (action [B] i32, logits [B, A] f32,
             sample_log_prob [B] f32, embedding [B, 32] f32)
    """
    horizon = pure_strategy.shape[0]
    batch = step_counts.shape[0]

    width = 128 * (-(-action_size // 128))         # lane-padded logits width
    t_pad = 128 * (-(-horizon // 128))             # lane-padded strategy length

    batch8 = 8 * (-(-batch // 8))
    block_b = min(batch8, max_block_b)             # multiple of 8
    batch_p = block_b * (-(-batch // block_b))
    grid = (batch_p // block_b,)                   # (1,) for typical batches

    strat = pure_strategy.astype(jnp.int32)
    steps = jnp.clip(step_counts.astype(jnp.int32), 0, horizon - 1)

    # Integer action: exact tiny XLA gather in the wrapper (no f32 lane packing).
    action = strat[steps]

    steps_col = jnp.pad(steps, (0, batch_p - batch)).reshape(batch_p, 1)
    strat_row = jnp.pad(strat, (0, t_pad - horizon)).reshape(1, t_pad)

    grid_spec = pltpu.PrefetchScalarGridSpec(
        num_scalar_prefetch=0,
        grid=grid,
        in_specs=[
            pl.BlockSpec((block_b, 1), lambda i: (i, 0)),
            pl.BlockSpec((1, t_pad), lambda i: (0, 0)),
        ],
        out_specs=pl.BlockSpec((block_b, width), lambda i: (i, 0)),
    )

    logits_padded = pl.pallas_call(
        _pure_strategy_kernel,
        out_shape=jax.ShapeDtypeStruct((batch_p, width), jnp.float32),
        grid_spec=grid_spec,
        compiler_params=pltpu.CompilerParams(
            dimension_semantics=("parallel",)),    # splits across v7x TCs when grid > 1
    )(steps_col, strat_row)

    logits = logits_padded[:batch, :action_size]

    # Constant outputs: compile-time constants, produced in the wrapper.
    sample_log_prob = jnp.zeros((batch,), jnp.float32)
    embedding = jnp.zeros((batch, 32), jnp.float32)
    return action, logits, sample_log_prob, embedding


def pure_strategy_forward(pure_strategy, step_count, action_size):
    """Single-item forward matching the PyTorch module call exactly."""
    steps = jnp.asarray(step_count, jnp.int32).reshape(1)
    action, logits, logp, emb = pure_strategy_forward_batched(
        pure_strategy, steps, action_size)
    return action[0], logits[0], logp[0], emb[0]


if __name__ == "__main__":
    key = jax.random.PRNGKey(0)

    # ---- case 1: small action space, batched ----
    action_size = 10     # discrete action count
    horizon = 8          # pure strategy length (one action per time step)
    batch = 16           # number of envs / tensordicts processed per call

    pure_strategy = jax.random.randint(
        key, (horizon,), minval=0, maxval=action_size, dtype=jnp.int32)
    step_counts = jnp.arange(batch, dtype=jnp.int32) % horizon

    action, logits, logp, emb = pure_strategy_forward_batched(
        pure_strategy, step_counts, action_size)
    jax.block_until_ready((action, logits, logp, emb))

    ref_actions = pure_strategy[jnp.clip(step_counts, 0, horizon - 1)]
    ref_logits = jax.nn.one_hot(ref_actions, action_size, dtype=jnp.float32)
    assert jnp.array_equal(action, ref_actions), (action, ref_actions)
    assert jnp.allclose(logits, ref_logits), (logits, ref_logits)
    assert logp.shape == (batch,) and bool(jnp.all(logp == 0.0))
    assert emb.shape == (batch, 32) and bool(jnp.all(emb == 0.0))

    # ---- case 2: 128-aligned action space + non-multiple-of-8 batch (padding path) ----
    key2 = jax.random.PRNGKey(1)
    action_size2, horizon2, batch2 = 128, 12, 20
    strat2 = jax.random.randint(key2, (horizon2,), 0, action_size2, dtype=jnp.int32)
    steps2 = jax.random.randint(jax.random.PRNGKey(2), (batch2,), 0, horizon2, dtype=jnp.int32)

    a2, l2, p2, e2 = pure_strategy_forward_batched(strat2, steps2, action_size2)
    jax.block_until_ready((a2, l2, p2, e2))
    ref_a2 = strat2[jnp.clip(steps2, 0, horizon2 - 1)]
    ref_l2 = jax.nn.one_hot(ref_a2, action_size2, dtype=jnp.float32)
    assert l2.shape == (batch2, action_size2)
    assert jnp.array_equal(a2, ref_a2)
    assert jnp.allclose(l2, ref_l2)

    # ---- case 3: single-item path (matches the PyTorch module signature) ----
    step_count = 3
    a1, l1, p1, e1 = pure_strategy_forward(pure_strategy, step_count, action_size)
    jax.block_until_ready((a1, l1, p1, e1))
    ref_a1 = int(pure_strategy[step_count])
    ref_l1 = jnp.zeros((action_size,), jnp.float32).at[ref_a1].set(1.0)
    assert int(a1) == ref_a1, (int(a1), ref_a1)
    assert jnp.allclose(l1, ref_l1), (l1, ref_l1)
    assert float(p1) == 0.0
    assert e1.shape == (32,) and bool(jnp.all(e1 == 0.0))

    print("KERNEL_OK")
</pallas_src>

<mosaic_0001>
module attributes {stable_mosaic.version = 11 : i64} {
  func.func @_pure_strategy_kernel(%arg0: i32, %arg1: memref<16x1xi32, #tpu.memory_space<vmem>>, %arg2: memref<1x128xi32, #tpu.memory_space<vmem>>, %arg3: memref<16x128xf32, #tpu.memory_space<vmem>>) attributes {dimension_semantics = [#tpu.dimension_semantics<parallel>], iteration_bounds = array<i64: 1>, scalar_prefetch = 0 : i64, scratch_operands = 0 : i64, tpu.core_type = #tpu.core_type<tc>, window_params = [{transform_indices = @transform_0, window_bounds = array<i64: 16, 1>}, {pipeline_mode = #tpu.pipeline_mode<synchronous>, transform_indices = @transform_1, window_bounds = array<i64: 1, 128>}, {transform_indices = @transform_2, window_bounds = array<i64: 16, 128>}]} {
    %c0 = arith.constant 0 : index
    %c0_0 = arith.constant 0 : index
    %0 = vector.load %arg1[%c0, %c0_0] : memref<16x1xi32, #tpu.memory_space<vmem>>, vector<16x1xi32>
    %1 = tpu.iota {dimensions = array<i32: 1>} : vector<16x128xi32>
    %2 = vector.broadcast %0 : vector<16x1xi32> to vector<16x128xi32>
    %3 = arith.cmpi eq, %1, %2 : vector<16x128xi32>
    %4 = arith.extui %3 : vector<16x128xi1> to vector<16x128xi32>
    %c0_1 = arith.constant 0 : index
    %c0_2 = arith.constant 0 : index
    %5 = vector.load %arg2[%c0_1, %c0_2] : memref<1x128xi32, #tpu.memory_space<vmem>>, vector<1x128xi32>
    %6 = vector.broadcast %5 : vector<1x128xi32> to vector<16x128xi32>
    %7 = arith.muli %4, %6 : vector<16x128xi32>
    %cst = arith.constant dense<0> : vector<16xi32>
    %8 = vector.multi_reduction <add>, %7, %cst [1] : vector<16x128xi32> to vector<16xi32>
    %9 = vector.shape_cast %8 : vector<16xi32> to vector<16x1xi32>
    %10 = tpu.iota {dimensions = array<i32: 1>} : vector<16x128xi32>
    %11 = vector.broadcast %9 : vector<16x1xi32> to vector<16x128xi32>
    %12 = arith.cmpi eq, %10, %11 : vector<16x128xi32>
    %13 = arith.extui %12 : vector<16x128xi1> to vector<16x128xi32>
    %14 = arith.sitofp %13 : vector<16x128xi32> to vector<16x128xf32>
    %c0_3 = arith.constant 0 : index
    %c0_4 = arith.constant 0 : index
    %15 = vector.load %arg3[%c0_3, %c0_4] : memref<16x128xf32, #tpu.memory_space<vmem>>, vector<16x128xf32>
    tpu.vector_store %arg3[%c0_3, %c0_4], %14 {strides = array<i32>} : memref<16x128xf32, #tpu.memory_space<vmem>>, vector<16x128xf32>,
    return
  }
  func.func @transform_0(%arg0: i32) -> (i32, i32) {
    %c0_i32 = arith.constant 0 : i32
    %c0_i32_0 = arith.constant 0 : i32
    return %arg0, %c0_i32 : i32, i32
  }
  func.func @transform_1(%arg0: i32) -> (i32, i32) {
    %c0_i32 = arith.constant 0 : i32
    %c0_i32_0 = arith.constant 0 : i32
    %c0_i32_1 = arith.constant 0 : i32
    return %c0_i32, %c0_i32_0 : i32, i32
  }
  func.func @transform_2(%arg0: i32) -> (i32, i32) {
    %c0_i32 = arith.constant 0 : i32
    %c0_i32_0 = arith.constant 0 : i32
    return %arg0, %c0_i32 : i32, i32
  }
}

</mosaic_0001>

<llo_original>
// kernel: tpu_custom_call.1
$region0: #{tpu_custom_call.1}
  #allocation0 [shape = 'u32[]', space=smem, size = 0x4, offset = 0x4, fixed_abs, tag = 'smem constant byte address 0x4 - core index']
  #allocation1 [shape = 'u32[144,128]{1,0:T(1,128)}', space=vmem, size = 0x12000, scoped, tag = 'internal scratch']
  %s0 = inlined_call_operand.vmem [shape: s32[16,1], index: 0, kind: input, shape index: {}]
  %s1 = inlined_call_operand.vmem [shape: s32[1,128], index: 1, kind: input, shape index: {}]
  %s2 = inlined_call_operand.hbm [shape: f32[16,128], index: 2, kind: output, shape index: {}]
  %s3 = sld [smem:[#allocation0]]
  $region18: #{tpu_custom_call.1} parent=0
    _
  %s5 = ssub.s32 1, %s3
  %s6 = scalar_select 0, %s5, %s3
  $region1: #{tpu_custom_call.1} parent=0
    #allocation2 [shape = 'u8[8192]{0}', space=vmem, size = 0x2000, scoped, tag = 'output window, operand 0, single buffered']
    #allocation3 [shape = 's32[1]{0}', space=sflag, size = 0x4, scoped, tag = 'scoped memory for tpu_custom_call.1']
    %7 = vsyncpa [#allocation3], 0
    // Predicated region
    $region2: #{tpu_custom_call.1} parent=1 // pred_check
      _
    $region3: #{tpu_custom_call.1} parent=1 // pred_check_branch
      %9 = sbr.rel (0) target = $region5
    $region4: #{tpu_custom_call.1} parent=1 // pred_region
      _
    $region5: #{tpu_custom_call.1} parent=1 // pred_fallthru
      _
    // Predicated region
    $region6: #{tpu_custom_call.1} parent=1 // pred_check
      _
    $region7: #{tpu_custom_call.1} parent=1 // pred_check_branch
      %11 = sbr.rel (0) target = $region9
    $region8: #{tpu_custom_call.1} parent=1 // pred_region
      _
    $region9: #{tpu_custom_call.1} parent=1 // pred_fallthru
      _
    %v12 = vld [vmem:[%s0] sm:$0xff]
    %v13 = vld [vmem:[%s0 + $0x8] sm:$0xff]
    %v14 = vlaneseq
    %v15 = vand.u32 %v14, 127
    %16 = vset.pattern.permute.xlu0 0
    %17 = vperm.xlu0 %16, %v12
    %v18 = vpop.permute.xlu0 %17
    %19 = vset.pattern.permute.xlu0 0
    %20 = vperm.xlu0 %19, %v13
    %v21 = vpop.permute.xlu0 %20
    %vm22 = vcmp.eq.s32.totalorder %v15, %v18
    %vm23 = vcmp.eq.s32.totalorder %v15, %v21
    %v24 = vsel %vm22, 1, 0
    %v25 = vsel %vm23, 1, 0
    %v26 = vld [vmem:[%s1] sm:$0x1]
    %v27 = vlaneseq
    %v28 = vshrl.u32 %v27, 7
    %v29 = vsub.s32 0, %v28
    %v30 = vrot.slane %v26, %v29
    %v31 = vmul.u32 %v24, %v30
    %v32 = vmul.u32 %v25, %v30
    %v33 = vand.u32 %v31, 65535
    %v34 = vshrl.u32 %v31, 16
    %v35 = vcvt.s32.f32 %v33
    %v36 = vcvt.s32.f32 %v34
    %37 = vadd.xlane.f32.xlu0 %v35
    %v38 = vpop.xlane.xlu0 %37
    %39 = vadd.xlane.f32.xlu0 %v36
    %v40 = vpop.xlane.xlu0 %39
    %v41 = vcvt.f32.s32 %v38
    %v42 = vcvt.f32.s32 %v40
    %v43 = vshll.u32 %v42, 16
    %v44 = vadd.s32 %v43, %v41
    %v45 = vand.u32 %v32, 65535
    %v46 = vshrl.u32 %v32, 16
    %v47 = vcvt.s32.f32 %v45
    %v48 = vcvt.s32.f32 %v46
    %49 = vadd.xlane.f32.xlu0 %v47
    %v50 = vpop.xlane.xlu0 %49
    %51 = vadd.xlane.f32.xlu0 %v48
    %v52 = vpop.xlane.xlu0 %51
    %v53 = vcvt.f32.s32 %v50
    %v54 = vcvt.f32.s32 %v52
    %v55 = vshll.u32 %v54, 16
    %v56 = vadd.s32 %v55, %v53
    %vm57 = vcmp.eq.s32.totalorder %v15, %v44
    %vm58 = vcmp.eq.s32.totalorder %v15, %v56
    %v59 = vsel %vm57, 1, 0
    %v60 = vsel %vm58, 1, 0
    %v61 = vcvt.s32.f32 %v59
    %v62 = vcvt.s32.f32 %v60
    %63 = vst [vmem:[#allocation2] sm:$0xff] %v61
    %64 = vst [vmem:[#allocation2 + $0x8] sm:$0xff] %v62
    // Predicated region
    $region10: #{tpu_custom_call.1} parent=1 // pred_check
      _
    $region11: #{tpu_custom_call.1} parent=1 // pred_check_branch
      %66 = sbr.rel (0) target = $region13
    $region12: #{tpu_custom_call.1} parent=1 // pred_region
      %s68 = ssub.s32 256, 256
      %69 = vsyncadd [#allocation3], %s68
      %s70 = sshll.u32 [#allocation2], 4
      %s71 = int_to_ptr.vmem [resolvable:$true] %s70
      %76 = dma.vmem_to_hbm [thread:$0]  %s71, 256, %s2, [#allocation3], 128, 128, 8
    $region13: #{tpu_custom_call.1} parent=1 // pred_fallthru
      _
    // Predicated region
    $region14: #{tpu_custom_call.1} parent=1 // pred_check
      _
    $region15: #{tpu_custom_call.1} parent=1 // pred_check_branch
      %78 = sbr.rel (0) target = $region17
    $region16: #{tpu_custom_call.1} parent=1 // pred_region
      %79 = dma.done [#allocation3], 256
    $region17: #{tpu_custom_call.1} parent=1 // pred_fallthru
      _
    %80 = vsyncpa [#allocation3], 1

</llo_original>
